<compile_context>
chip_gen: v7x
topology: tpu7x:2x2x1
jax: 0.10.0
libtpu: 0.0.40
codegen_flags: <defaults>
</compile_context>

<pallas_src>
import functools

import jax
import jax.numpy as jnp
from jax.experimental import pallas as pl
from jax.experimental.pallas import tpu as pltpu


def _round_up(x, m):
    return (x + m - 1) // m * m


def _pad2(x, rows, cols):
    pr, pc = rows - x.shape[0], cols - x.shape[1]
    if pr or pc:
        x = jnp.pad(x, ((0, pr), (0, pc)))
    return x


def _layer_kernel(adj_ref, feat_ref, w_ref, b_ref, out_ref, acc_ref, *,
                  deg_col):
    # adj_ref : [tN, tV] bf16  adjacency tile (gathered rows of selected nodes)
    # feat_ref: [tV, Fp] bf16  feature tile for this V-chunk; column `deg_col`
    #                          is all-ones on real rows (degree column).
    # w_ref   : [Fp, Hp] f32   linear weight (rows >= F are zero)
    # b_ref   : [1,  Hp] f32   linear bias
    # out_ref : [tN, Hp] f32
    # acc_ref : [tN, Fp] f32   VMEM accumulator (neighbor-feature sums; column
    #                          `deg_col` holds the neighbor count)
    k = pl.program_id(1)

    @pl.when(k == 0)
    def _init():
        acc_ref[...] = jnp.zeros_like(acc_ref)

    # Aggregator: partial sum of neighbor features AND degree over this V-chunk
    # in a single MXU matmul (bf16 x bf16 -> f32 accumulate).
    acc_ref[...] += jnp.dot(adj_ref[...], feat_ref[...],
                            preferred_element_type=jnp.float32)

    @pl.when(k == pl.num_programs(1) - 1)
    def _finalize():
        acc = acc_ref[...]                                          # [tN, Fp]
        # Linear on the un-normalized aggregate (W's padded rows, including the
        # degree column's row, are zero so the extra column is inert here).
        h = jnp.dot(acc, w_ref[...],
                    preferred_element_type=jnp.float32)             # [tN, Hp]
        # Deferred mean: apply the row scale on the small [tN, Hp] tile.
        deg = jnp.maximum(acc[:, deg_col:deg_col + 1], 1.0)         # [tN, 1]
        out_ref[...] = jnp.maximum(h / deg + b_ref[...], 0.0)


@functools.partial(jax.jit, static_argnames=("tile_n", "tile_v"))
def model_layer(node, graph, features, weight, bias, *, tile_n=128, tile_v=512):
    """node: [N] int32, graph: [V, V] 0/1 adjacency, features: [V, F],
    weight: [F, H], bias: [H]  ->  [N, H] float32."""
    N = node.shape[0]
    V, F = features.shape
    H = weight.shape[1]

    # Glue: gather the adjacency rows of the selected nodes (fused with the
    # bf16 cast by XLA).  See TODO(synk) above about an in-kernel DMA gather.
    adj = jnp.take(graph, node, axis=0)

    # Tile / pad sizes: lane-dense (multiples of 128) on V / F / H, sublane
    # aligned (multiple of 8) on N.  Fp reserves one extra column (index F) for
    # the degree ("ones") column.  Defaults sized for v7x's 64 MiB VMEM.
    tn = min(tile_n, _round_up(N, 8))
    tv = min(tile_v, _round_up(V, 128))
    Np = _round_up(N, tn)
    Vp = _round_up(V, tv)
    Fp = _round_up(F + 1, 128)
    Hp = _round_up(H, 128)

    adj_p = _pad2(adj.astype(jnp.float32), Np, Vp).astype(jnp.bfloat16)

    feat_aug = jnp.concatenate(
        [features.astype(jnp.float32), jnp.ones((V, 1), jnp.float32)], axis=1)
    feat_p = _pad2(feat_aug, Vp, Fp).astype(jnp.bfloat16)

    w_p = _pad2(weight.astype(jnp.float32), Fp, Hp)      # rows >= F are zero
    b_p = jnp.pad(bias.astype(jnp.float32), (0, Hp - H)).reshape(1, Hp)

    grid = (Np // tn, Vp // tv)

    # Explicit VMEM budget: double-buffered inputs/outputs + scratch + headroom.
    vmem_est = (2 * (tn * tv * 2 + tv * Fp * 2 + Fp * Hp * 4 + Hp * 4
                     + tn * Hp * 4)
                + tn * Fp * 4)
    vmem_limit = int(max(vmem_est + (8 << 20), 32 << 20))

    kernel = functools.partial(_layer_kernel, deg_col=F)

    out_p = pl.pallas_call(
        kernel,
        out_shape=jax.ShapeDtypeStruct((Np, Hp), jnp.float32),
        grid_spec=pltpu.PrefetchScalarGridSpec(
            num_scalar_prefetch=0,
            grid=grid,
            in_specs=[
                pl.BlockSpec((tn, tv), lambda i, k: (i, k)),   # adjacency tile
                pl.BlockSpec((tv, Fp), lambda i, k: (k, 0)),   # feature chunk
                pl.BlockSpec((Fp, Hp), lambda i, k: (0, 0)),   # weight
                pl.BlockSpec((1, Hp), lambda i, k: (0, 0)),    # bias
            ],
            out_specs=pl.BlockSpec((tn, Hp), lambda i, k: (i, 0)),
            scratch_shapes=[
                pltpu.VMEM((tn, Fp), jnp.float32),             # aggregate acc
            ],
        ),
        compiler_params=pltpu.CompilerParams(
            dimension_semantics=("parallel", "arbitrary"),
            vmem_limit_bytes=vmem_limit,
        ),
    )(adj_p, feat_p, w_p, b_p)

    return out_p[:N, :H]


def _reference(node, graph, features, weight, bias):
    # Same bf16 input quantization the kernel sees; math in f32.
    adj = jnp.take(graph, node, axis=0).astype(jnp.bfloat16).astype(jnp.float32)
    feat = features.astype(jnp.bfloat16).astype(jnp.float32)
    agg = adj @ feat
    deg = jnp.maximum(jnp.sum(adj, axis=-1, keepdims=True), 1.0)
    mean = agg / deg
    return jnp.maximum(mean @ weight.astype(jnp.float32)
                       + bias.astype(jnp.float32), 0.0)


if __name__ == "__main__":
    key = jax.random.PRNGKey(0)
    k1, k2, k3, k4 = jax.random.split(key, 4)

    V, F, H, N = 16, 32, 32, 8     # total nodes, feat dim, hidden dim, batch

    # Deterministic synthetic graph: symmetric 0/1 adjacency, no self-loops.
    adj_logits = jax.random.uniform(k1, (V, V))
    graph = (adj_logits + adj_logits.T > 1.0).astype(jnp.float32)
    graph = graph * (1.0 - jnp.eye(V, dtype=jnp.float32))

    features = jax.random.normal(k2, (V, F), dtype=jnp.float32)
    node = jax.random.randint(k3, (N,), 0, V, dtype=jnp.int32)

    # Deterministic "Mean" linear parameters.
    weight = jax.random.normal(k4, (F, H), dtype=jnp.float32) * 0.1
    bias = jnp.linspace(-0.1, 0.1, H, dtype=jnp.float32)

    out = model_layer(node, graph, features, weight, bias)
    out = jax.block_until_ready(out)

    ref = _reference(node, graph, features, weight, bias)
    assert out.shape == (N, H)
    assert jnp.allclose(out, ref, atol=1e-4, rtol=1e-4), (
        float(jnp.max(jnp.abs(out - ref))))

    print("KERNEL_OK")
</pallas_src>

<mosaic_0001>
module attributes {stable_mosaic.version = 11 : i64} {
  func.func @_layer_kernel(%arg0: i32, %arg1: i32, %arg2: memref<8x128xbf16, #tpu.memory_space<vmem>>, %arg3: memref<128x128xbf16, #tpu.memory_space<vmem>>, %arg4: memref<128x128xf32, #tpu.memory_space<vmem>>, %arg5: memref<1x128xf32, #tpu.memory_space<vmem>>, %arg6: memref<8x128xf32, #tpu.memory_space<vmem>>, %arg7: memref<8x128xf32, #tpu.memory_space<vmem>>) attributes {dimension_semantics = [#tpu.dimension_semantics<parallel>, #tpu.dimension_semantics<arbitrary>], iteration_bounds = array<i64: 1, 1>, scalar_prefetch = 0 : i64, scratch_operands = 1 : i64, tpu.core_type = #tpu.core_type<tc>, window_params = [{transform_indices = @transform_0, window_bounds = array<i64: 8, 128>}, {transform_indices = @transform_1, window_bounds = array<i64: 128, 128>}, {pipeline_mode = #tpu.pipeline_mode<synchronous>, transform_indices = @transform_2, window_bounds = array<i64: 128, 128>}, {pipeline_mode = #tpu.pipeline_mode<synchronous>, transform_indices = @transform_3, window_bounds = array<i64: 1, 128>}, {transform_indices = @transform_4, window_bounds = array<i64: 8, 128>}]} {
    %c0_i32 = arith.constant 0 : i32
    %0 = arith.cmpi eq, %arg1, %c0_i32 : i32
    %1 = arith.extui %0 : i1 to i32
    %c0_i32_0 = arith.constant 0 : i32
    %2 = arith.cmpi ne, %1, %c0_i32_0 : i32
    scf.if %2 {
      %cst_10 = arith.constant 0.000000e+00 : f32
      %12 = vector.broadcast %cst_10 : f32 to vector<8x128xf32>
      %c0_11 = arith.constant 0 : index
      %c0_12 = arith.constant 0 : index
      %13 = vector.load %arg7[%c0_11, %c0_12] : memref<8x128xf32, #tpu.memory_space<vmem>>, vector<8x128xf32>
      tpu.vector_store %arg7[%c0_11, %c0_12], %12 {strides = array<i32>} : memref<8x128xf32, #tpu.memory_space<vmem>>, vector<8x128xf32>,
    } else {
    }
    %c0 = arith.constant 0 : index
    %c0_1 = arith.constant 0 : index
    %3 = vector.load %arg7[%c0, %c0_1] : memref<8x128xf32, #tpu.memory_space<vmem>>, vector<8x128xf32>
    %c0_2 = arith.constant 0 : index
    %c0_3 = arith.constant 0 : index
    %4 = vector.load %arg2[%c0_2, %c0_3] : memref<8x128xbf16, #tpu.memory_space<vmem>>, vector<8x128xbf16>
    %c0_4 = arith.constant 0 : index
    %c0_5 = arith.constant 0 : index
    %5 = vector.load %arg3[%c0_4, %c0_5] : memref<128x128xbf16, #tpu.memory_space<vmem>>, vector<128x128xbf16>
    %cst = arith.constant dense<0.000000e+00> : vector<8x128xf32>
    %6 = tpu.matmul %4, %5, %cst {dimension_numbers = #tpu.dot_dimension_numbers<[1], [0], [0], [1], [0, 0, 1, 1], [], []>} : vector<8x128xbf16>, vector<128x128xbf16>, vector<8x128xf32> -> vector<8x128xf32>
    %7 = arith.addf %3, %6 : vector<8x128xf32>
    %c0_6 = arith.constant 0 : index
    %c0_7 = arith.constant 0 : index
    %8 = vector.load %arg7[%c0_6, %c0_7] : memref<8x128xf32, #tpu.memory_space<vmem>>, vector<8x128xf32>
    tpu.vector_store %arg7[%c0_6, %c0_7], %7 {strides = array<i32>} : memref<8x128xf32, #tpu.memory_space<vmem>>, vector<8x128xf32>,
    %c0_i32_8 = arith.constant 0 : i32
    %9 = arith.cmpi eq, %arg1, %c0_i32_8 : i32
    %10 = arith.extui %9 : i1 to i32
    %c0_i32_9 = arith.constant 0 : i32
    %11 = arith.cmpi ne, %10, %c0_i32_9 : i32
    scf.if %11 {
      %c0_10 = arith.constant 0 : index
      %c0_11 = arith.constant 0 : index
      %12 = vector.load %arg7[%c0_10, %c0_11] : memref<8x128xf32, #tpu.memory_space<vmem>>, vector<8x128xf32>
      %c0_12 = arith.constant 0 : index
      %c0_13 = arith.constant 0 : index
      %13 = vector.load %arg4[%c0_12, %c0_13] : memref<128x128xf32, #tpu.memory_space<vmem>>, vector<128x128xf32>
      %cst_14 = arith.constant dense<0.000000e+00> : vector<8x128xf32>
      %14 = tpu.matmul %12, %13, %cst_14 {dimension_numbers = #tpu.dot_dimension_numbers<[1], [0], [0], [1], [0, 0, 1, 1], [], []>} : vector<8x128xf32>, vector<128x128xf32>, vector<8x128xf32> -> vector<8x128xf32>
      %15 = vector.extract_strided_slice %12 {offsets = [0, 32], sizes = [8, 1], strides = [1, 1]} : vector<8x128xf32> to vector<8x1xf32>
      %cst_15 = arith.constant 1.000000e+00 : f32
      %16 = vector.broadcast %cst_15 : f32 to vector<8x1xf32>
      %17 = arith.maximumf %15, %16 : vector<8x1xf32>
      %18 = vector.broadcast %17 : vector<8x1xf32> to vector<8x128xf32>
      %19 = arith.divf %14, %18 : vector<8x128xf32>
      %c0_16 = arith.constant 0 : index
      %c0_17 = arith.constant 0 : index
      %20 = vector.load %arg5[%c0_16, %c0_17] : memref<1x128xf32, #tpu.memory_space<vmem>>, vector<1x128xf32>
      %21 = vector.broadcast %20 : vector<1x128xf32> to vector<8x128xf32>
      %22 = arith.addf %19, %21 : vector<8x128xf32>
      %cst_18 = arith.constant 0.000000e+00 : f32
      %23 = vector.broadcast %cst_18 : f32 to vector<8x128xf32>
      %24 = arith.maximumf %22, %23 : vector<8x128xf32>
      %c0_19 = arith.constant 0 : index
      %c0_20 = arith.constant 0 : index
      %25 = vector.load %arg6[%c0_19, %c0_20] : memref<8x128xf32, #tpu.memory_space<vmem>>, vector<8x128xf32>
      tpu.vector_store %arg6[%c0_19, %c0_20], %24 {strides = array<i32>} : memref<8x128xf32, #tpu.memory_space<vmem>>, vector<8x128xf32>,
    } else {
    }
    return
  }
  func.func @transform_0(%arg0: i32, %arg1: i32) -> (i32, i32) {
    %c0_i32 = arith.constant 0 : i32
    return %arg0, %arg1 : i32, i32
  }
  func.func @transform_1(%arg0: i32, %arg1: i32) -> (i32, i32) {
    %c0_i32 = arith.constant 0 : i32
    %c0_i32_0 = arith.constant 0 : i32
    return %arg1, %c0_i32 : i32, i32
  }
  func.func @transform_2(%arg0: i32, %arg1: i32) -> (i32, i32) {
    %c0_i32 = arith.constant 0 : i32
    %c0_i32_0 = arith.constant 0 : i32
    %c0_i32_1 = arith.constant 0 : i32
    return %c0_i32, %c0_i32_0 : i32, i32
  }
  func.func @transform_3(%arg0: i32, %arg1: i32) -> (i32, i32) {
    %c0_i32 = arith.constant 0 : i32
    %c0_i32_0 = arith.constant 0 : i32
    %c0_i32_1 = arith.constant 0 : i32
    return %c0_i32, %c0_i32_0 : i32, i32
  }
  func.func @transform_4(%arg0: i32, %arg1: i32) -> (i32, i32) {
    %c0_i32 = arith.constant 0 : i32
    %c0_i32_0 = arith.constant 0 : i32
    return %arg0, %c0_i32 : i32, i32
  }
}

</mosaic_0001>

<llo_original>
// kernel: model_layer.1
$region0: #{model_layer.1}
  #allocation0 [shape = 'u32[]', space=smem, size = 0x4, offset = 0x4, fixed_abs, tag = 'smem constant byte address 0x4 - core index']
  #allocation1 [shape = 'u32[144,128]{1,0:T(1,128)}', space=vmem, size = 0x12000, scoped, tag = 'internal scratch']
  #allocation2 [shape = 'f32[8,128]{1,0:T(8,128)}', space=vmem, size = 0x1000, scoped, tag = 'scratch operand']
  %s0 = inlined_call_operand.vmem [shape: bf16[8,128], index: 0, kind: input, shape index: {}]
  %s1 = inlined_call_operand.vmem [shape: bf16[128,128], index: 1, kind: input, shape index: {}]
  %s2 = inlined_call_operand.vmem [shape: f32[128,128], index: 2, kind: input, shape index: {}]
  %s3 = inlined_call_operand.vmem [shape: f32[1,128], index: 3, kind: input, shape index: {}]
  %s4 = inlined_call_operand.hbm [shape: f32[8,128], index: 4, kind: output, shape index: {}]
  %s5 = sld [smem:[#allocation0]]
  $region34: #{model_layer.1} parent=0
    _
  %s7 = ssub.s32 1, %s5
  %s8 = scalar_select 0, %s7, %s5
  $region1: #{model_layer.1} parent=0
    #allocation3 [shape = 'u8[4096]{0}', space=vmem, size = 0x1000, scoped, tag = 'output window, operand 0, single buffered']
    #allocation4 [shape = 's32[1]{0}', space=sflag, size = 0x4, scoped, tag = 'scoped memory for model_layer.1']
    %9 = vsyncpa [#allocation4], 0
    // Predicated region
    $region2: #{model_layer.1} parent=1 // pred_check
      _
    $region3: #{model_layer.1} parent=1 // pred_check_branch
      %11 = sbr.rel (0) target = $region5
    $region4: #{model_layer.1} parent=1 // pred_region
      _
    $region5: #{model_layer.1} parent=1 // pred_fallthru
      _
    // Predicated region
    $region6: #{model_layer.1} parent=1 // pred_check
      _
    $region7: #{model_layer.1} parent=1 // pred_check_branch
      %13 = sbr.rel (0) target = $region9
    $region8: #{model_layer.1} parent=1 // pred_region
      _
    $region9: #{model_layer.1} parent=1 // pred_fallthru
      _
    // Predicated region
    $region10: #{model_layer.1} parent=1 // pred_check
      _
    $region11: #{model_layer.1} parent=1 // pred_check_branch
      %15 = sbr.rel (0) target = $region13
    $region12: #{model_layer.1} parent=1 // pred_region
      _
    $region13: #{model_layer.1} parent=1 // pred_fallthru
      _
    // Predicated region
    $region14: #{model_layer.1} parent=1 // pred_check
      _
    $region15: #{model_layer.1} parent=1 // pred_check_branch
      %17 = sbr.rel (0) target = $region17
    $region16: #{model_layer.1} parent=1 // pred_region
      _
    $region17: #{model_layer.1} parent=1 // pred_fallthru
      _
    %p19 = scmp.eq.s32.totalorder 0, 0
    // Predicated region
    $region18: #{model_layer.1} parent=1 // pred_check
      %p20 = pneg %p19
    $region19: #{model_layer.1} parent=1 // pred_check_branch
      %22 = sbr.rel (%p20) target = $region21
    $region20: #{model_layer.1} parent=1 // pred_region
      %23 = vst [vmem:[#allocation2] sm:$0xff] 0.0
    $region21: #{model_layer.1} parent=1 // pred_fallthru
      _
    %v24 = vld [vmem:[#allocation2] sm:$0xff]
    %v25 = vld [vmem:[%s0] sm:$0xf]
    %v26 = vld [vmem:[%s1] sm:$0xf]
    %v27 = vld [vmem:[%s1 + $0x4] sm:$0xf]
    %v28 = vld [vmem:[%s1 + $0x8] sm:$0xf]
    %v29 = vld [vmem:[%s1 + $0xc] sm:$0xf]
    %v30 = vld [vmem:[%s1 + $0x10] sm:$0xf]
    %v31 = vld [vmem:[%s1 + $0x14] sm:$0xf]
    %v32 = vld [vmem:[%s1 + $0x18] sm:$0xf]
    %v33 = vld [vmem:[%s1 + $0x1c] sm:$0xf]
    %v34 = vld [vmem:[%s1 + $0x20] sm:$0xf]
    %v35 = vld [vmem:[%s1 + $0x24] sm:$0xf]
    %v36 = vld [vmem:[%s1 + $0x28] sm:$0xf]
    %v37 = vld [vmem:[%s1 + $0x2c] sm:$0xf]
    %v38 = vld [vmem:[%s1 + $0x30] sm:$0xf]
    %v39 = vld [vmem:[%s1 + $0x34] sm:$0xf]
    %v40 = vld [vmem:[%s1 + $0x38] sm:$0xf]
    %v41 = vld [vmem:[%s1 + $0x3c] sm:$0xf]
    %v58 = vunpack.c.l.b16 %v26
    %v59 = vunpack.c.l.b16 %v27
    %v60 = vunpack.c.l.b16 %v28
    %v61 = vunpack.c.l.b16 %v29
    %v62 = vunpack.c.l.b16 %v30
    %v63 = vunpack.c.l.b16 %v31
    %v64 = vunpack.c.l.b16 %v32
    %v65 = vunpack.c.l.b16 %v33
    %v66 = vunpack.c.l.b16 %v34
    %v67 = vunpack.c.l.b16 %v35
    %v68 = vunpack.c.l.b16 %v36
    %v69 = vunpack.c.l.b16 %v37
    %v70 = vunpack.c.l.b16 %v38
    %v71 = vunpack.c.l.b16 %v39
    %v72 = vunpack.c.l.b16 %v40
    %v73 = vunpack.c.l.b16 %v41
    %v74 = vpack.c.b16 %v59, %v58
    %v75 = vpack.c.b16 %v61, %v60
    %v76 = vpack.c.b16 %v63, %v62
    %v77 = vpack.c.b16 %v65, %v64
    %v78 = vpack.c.b16 %v67, %v66
    %v79 = vpack.c.b16 %v69, %v68
    %v80 = vpack.c.b16 %v71, %v70
    %v81 = vpack.c.b16 %v73, %v72
    %90 = vmatprep.subr.bf16.mxu0 0
    %91 = vmatpush1.bf16.msra.mxu0 %v74
    %92 = vmatprep.subr.bf16.mxu0 0
    %93 = vmatpush1.bf16.msra.mxu0 %v75
    %94 = vmatprep.subr.bf16.mxu0 0
    %95 = vmatpush1.bf16.msra.mxu0 %v76
    %96 = vmatprep.subr.bf16.mxu0 0
    %97 = vmatpush1.bf16.msra.mxu0 %v77
    %98 = vmatprep.subr.bf16.mxu0 0
    %99 = vmatpush1.bf16.msra.mxu0 %v78
    %100 = vmatprep.subr.bf16.mxu0 0
    %101 = vmatpush1.bf16.msra.mxu0 %v79
    %102 = vmatprep.subr.bf16.mxu0 0
    %103 = vmatpush1.bf16.msra.mxu0 %v80
    %104 = vmatprep.subr.bf16.mxu0 0
    %105 = vmatpush1.bf16.msra.mxu0 %v81
    %106 = vmatprep.subr.bf16.mxu0 0
    %107 = vmatpush1.bf16.msra.mxu0 0
    %108 = vmatprep.subr.bf16.mxu0 0
    %109 = vmatpush1.bf16.msra.mxu0 0
    %110 = vmatprep.subr.bf16.mxu0 0
    %111 = vmatpush1.bf16.msra.mxu0 0
    %112 = vmatprep.subr.bf16.mxu0 0
    %113 = vmatpush1.bf16.msra.mxu0 0
    %114 = vmatprep.subr.bf16.mxu0 0
    %115 = vmatpush1.bf16.msra.mxu0 0
    %116 = vmatprep.subr.bf16.mxu0 0
    %117 = vmatpush1.bf16.msra.mxu0 0
    %118 = vmatprep.subr.bf16.mxu0 0
    %119 = vmatpush1.bf16.msra.mxu0 0
    %120 = vmatprep.subr.bf16.mxu0 0
    %121 = vmatpush1.bf16.msra.mxu0 0
    %122 = vmatprep.mubr.bf16.mxu0 0
    %123 = vmatmul.mubr.bf16.gmra.mrb[0].mxu0 %v25
    %v124 = vpop.f32.mrb[0].mxu0
    %v125 = vadd.f32 0.0, %v124
    %v126 = vpop.f32.mrb[0].mxu0
    %v127 = vpop.f32.mrb[0].mxu0
    %v128 = vpop.f32.mrb[0].mxu0
    %129 = vdwg.mxu0
    %v130 = vadd.f32 %v24, %v125
    %131 = vst [vmem:[#allocation2] sm:$0xff] %v130
    // Predicated region
    $region22: #{model_layer.1} parent=1 // pred_check
      %p132 = pneg %p19
    $region23: #{model_layer.1} parent=1 // pred_check_branch
      %134 = sbr.rel (%p132) target = $region25
    $region24: #{model_layer.1} parent=1 // pred_region
      %v135 = vld [vmem:[#allocation2] sm:$0xff]
      %v136 = vld [vmem:[%s2] sm:$0xff]
      %v137 = vld [vmem:[%s2 + $0x8] sm:$0xff]
      %v138 = vld [vmem:[%s2 + $0x10] sm:$0xff]
      %v139 = vld [vmem:[%s2 + $0x18] sm:$0xff]
      %v140 = vld [vmem:[%s2 + $0x20] sm:$0xff]
      %v141 = vld [vmem:[%s2 + $0x28] sm:$0xff]
      %v142 = vld [vmem:[%s2 + $0x30] sm:$0xff]
      %v143 = vld [vmem:[%s2 + $0x38] sm:$0xff]
      %v144 = vld [vmem:[%s2 + $0x40] sm:$0xff]
      %v145 = vld [vmem:[%s2 + $0x48] sm:$0xff]
      %v146 = vld [vmem:[%s2 + $0x50] sm:$0xff]
      %v147 = vld [vmem:[%s2 + $0x58] sm:$0xff]
      %v148 = vld [vmem:[%s2 + $0x60] sm:$0xff]
      %v149 = vld [vmem:[%s2 + $0x68] sm:$0xff]
      %v150 = vld [vmem:[%s2 + $0x70] sm:$0xff]
      %v151 = vld [vmem:[%s2 + $0x78] sm:$0xff]
      %152 = vmatprep.subr.mxu0 0.0
      %153 = vmatpush1.msra.mxu0 %v136
      %154 = vmatprep.subr.mxu0 0.0
      %155 = vmatpush1.msra.mxu0 %v137
      %156 = vmatprep.subr.mxu0 0.0
      %157 = vmatpush1.msra.mxu0 %v138
      %158 = vmatprep.subr.mxu0 0.0
      %159 = vmatpush1.msra.mxu0 %v139
      %160 = vmatprep.subr.mxu0 0.0
      %161 = vmatpush1.msra.mxu0 %v140
      %162 = vmatprep.subr.mxu0 0.0
      %163 = vmatpush1.msra.mxu0 %v141
      %164 = vmatprep.subr.mxu0 0.0
      %165 = vmatpush1.msra.mxu0 %v142
      %166 = vmatprep.subr.mxu0 0.0
      %167 = vmatpush1.msra.mxu0 %v143
      %168 = vmatprep.subr.mxu0 0.0
      %169 = vmatpush1.msra.mxu0 %v144
      %170 = vmatprep.subr.mxu0 0.0
      %171 = vmatpush1.msra.mxu0 %v145
      %172 = vmatprep.subr.mxu0 0.0
      %173 = vmatpush1.msra.mxu0 %v146
      %174 = vmatprep.subr.mxu0 0.0
      %175 = vmatpush1.msra.mxu0 %v147
      %176 = vmatprep.subr.mxu0 0.0
      %177 = vmatpush1.msra.mxu0 %v148
      %178 = vmatprep.subr.mxu0 0.0
      %179 = vmatpush1.msra.mxu0 %v149
      %180 = vmatprep.subr.mxu0 0.0
      %181 = vmatpush1.msra.mxu0 %v150
      %182 = vmatprep.subr.mxu0 0.0
      %183 = vmatpush1.msra.mxu0 %v151
      %184 = vmatprep.subr.mxu0 0.0
      %185 = vmatpush1.msra.mxu0 0.0
      %186 = vmatprep.subr.mxu0 0.0
      %187 = vmatpush1.msra.mxu0 0.0
      %188 = vmatprep.subr.mxu0 0.0
      %189 = vmatpush1.msra.mxu0 0.0
      %190 = vmatprep.subr.mxu0 0.0
      %191 = vmatpush1.msra.mxu0 0.0
      %192 = vmatprep.subr.mxu0 0.0
      %193 = vmatpush1.msra.mxu0 0.0
      %194 = vmatprep.subr.mxu0 0.0
      %195 = vmatpush1.msra.mxu0 0.0
      %196 = vmatprep.subr.mxu0 0.0
      %197 = vmatpush1.msra.mxu0 0.0
      %198 = vmatprep.subr.mxu0 0.0
      %199 = vmatpush1.msra.mxu0 0.0
      %200 = vmatprep.subr.mxu0 0.0
      %201 = vmatpush1.msra.mxu0 0.0
      %202 = vmatprep.subr.mxu0 0.0
      %203 = vmatpush1.msra.mxu0 0.0
      %204 = vmatprep.subr.mxu0 0.0
      %205 = vmatpush1.msra.mxu0 0.0
      %206 = vmatprep.subr.mxu0 0.0
      %207 = vmatpush1.msra.mxu0 0.0
      %208 = vmatprep.subr.mxu0 0.0
      %209 = vmatpush1.msra.mxu0 0.0
      %210 = vmatprep.subr.mxu0 0.0
      %211 = vmatpush1.msra.mxu0 0.0
      %212 = vmatprep.subr.mxu0 0.0
      %213 = vmatpush1.msra.mxu0 0.0
      %214 = vmatprep.subr.mxu0 0.0
      %215 = vmatpush1.msra.mxu0 0.0
      %216 = vmatprep.mubr.f32.mxu0 0.0
      %217 = vmatmul.mubr.f32.gmra.mrb[0].mxu0 %v135
      %v218 = vpop.f32.mrb[0].mxu0
      %v219 = vadd.f32 0.0, %v218
      %v220 = vpop.f32.mrb[0].mxu0
      %221 = vdwg.mxu0
      %v222 = vmax.f32 %v135, 1.0
      %224 = vset.pattern.permute.xlu0 32
      %225 = vperm.xlu0 %224, %v222
      %v226 = vpop.permute.xlu0 %225
      %v228 = vrcp.pop %v226
      %v229 = vmul.f32 %v219, %v228
      %v230 = vld [vmem:[%s3] sm:$0x1]
      %v232 = vlaneseq
      %v233 = vshrl.u32 %v232, 7
      %v234 = vsub.s32 0, %v233
      %v235 = vrot.slane %v230, %v234
      %v237 = vadd.f32 %v229, %v235
      %v238 = vmax.f32 %v237, 0.0
      %239 = vst [vmem:[#allocation3] sm:$0xff] %v238
    $region25: #{model_layer.1} parent=1 // pred_fallthru
      _
    // Predicated region
    $region26: #{model_layer.1} parent=1 // pred_check
      _
    $region27: #{model_layer.1} parent=1 // pred_check_branch
      %241 = sbr.rel (0) target = $region29
    $region28: #{model_layer.1} parent=1 // pred_region
      %s243 = ssub.s32 128, 128
      %244 = vsyncadd [#allocation4], %s243
      %s246 = sshll.u32 [#allocation3], 4
      %s247 = int_to_ptr.vmem [resolvable:$true] %s246
      %249 = dma.vmem_to_hbm [thread:$0]  %s247, 128, %s4, [#allocation4]
    $region29: #{model_layer.1} parent=1 // pred_fallthru
      _
    // Predicated region
    $region30: #{model_layer.1} parent=1 // pred_check
      _
    $region31: #{model_layer.1} parent=1 // pred_check_branch
      %251 = sbr.rel (0) target = $region33
    $region32: #{model_layer.1} parent=1 // pred_region
      %252 = dma.done [#allocation4], 128
    $region33: #{model_layer.1} parent=1 // pred_fallthru
      _
    %253 = vsyncpa [#allocation4], 1

</llo_original>
